<compile_context>
chip_gen: v6e
topology: v6e:2x2x1
jax: 0.10.0
libtpu: 0.0.40
codegen_flags: <defaults>
</compile_context>

<pallas_src>
import jax
import jax.numpy as jnp
import numpy as np
from jax.experimental import pallas as pl
from jax.experimental.pallas import tpu as pltpu

# Conservative per-call VMEM budget used when choosing the d_ff chunk size.
# Sized so the tiling also fits a v7x TensorCore (64 MiB VMEM, ~32 MiB default scoped).
_VMEM_BUDGET = 48 * 1024 * 1024


def _ffn_kernel(x_ref, w1_ref, b1_ref, w2_ref, b2_ref, o_ref, acc_ref):
    """One (row-tile, d_ff-chunk) grid step of the FFN."""
    k = pl.program_id(1)

    @pl.when(k == 0)
    def _():
        acc_ref[...] = jnp.zeros_like(acc_ref)

    # linear_1 chunk: bf16 MXU inputs, f32 accumulation; bias + ReLU in f32 (VPU).
    x = x_ref[...].astype(jnp.bfloat16)
    h = jnp.dot(x, w1_ref[...], preferred_element_type=jnp.float32)
    h = jnp.maximum(h + b1_ref[...], 0.0)

    # dropout: inference mode -> identity.

    # linear_2 chunk: accumulate the partial contraction over this d_ff chunk.
    acc_ref[...] += jnp.dot(h.astype(jnp.bfloat16), w2_ref[...],
                            preferred_element_type=jnp.float32)

    @pl.when(k == pl.num_programs(1) - 1)
    def _():
        o_ref[...] = (acc_ref[...] + b2_ref[...]).astype(o_ref.dtype)


def _spec(shape, index_map, buffers=None):
    """BlockSpec, optionally with an explicit buffer count (graceful fallback)."""
    if buffers is not None and hasattr(pl, "Buffered"):
        try:
            return pl.BlockSpec(shape, index_map, pipeline_mode=pl.Buffered(buffers))
        except TypeError:  # older jax without pipeline_mode on BlockSpec
            pass
    return pl.BlockSpec(shape, index_map)


def _vmem_estimate(tm, D, tff, n_ff, x_bytes, out_bytes):
    """Rough per-step VMEM footprint (bytes) for the chosen tiling, +25% headroom."""
    wbuf = 1 if n_ff == 1 else 2          # weight chunks: single-buffered when constant
    b = 2 * tm * D * x_bytes              # x tile, double buffered
    b += wbuf * D * tff * 2               # w1 chunk (bf16)
    b += wbuf * tff * 4                   # b1 chunk (f32)
    b += wbuf * tff * D * 2               # w2 chunk (bf16)
    b += 1 * D * 4                        # b2 (Buffered(1))
    b += 2 * tm * D * out_bytes           # out tile, double buffered
    b += tm * D * 4                       # f32 accumulator scratch
    b += tm * tff * 6                     # h intermediate (f32 + bf16 copy)
    return int(b * 1.25)


def _pick_ff_chunk(d_ff, D, tm, x_bytes, out_bytes, budget, target=2048):
    """Largest multiple-of-128 divisor of d_ff (<= target) whose tiling fits `budget`."""
    cands = [c for c in range(min(target, d_ff), 0, -128) if d_ff % c == 0]
    if not cands:
        cands = [d_ff]                    # no nice divisor -> single (full) chunk
    for c in cands:
        if _vmem_estimate(tm, D, c, d_ff // c, x_bytes, out_bytes) <= budget:
            return c
    return cands[-1]


def prepare_ffn_params(params):
    """One-time conversion: bf16 weights (halved DMA, MXU-native), f32 row biases."""
    d_ff = params["w1"].shape[1]
    d_model = params["w2"].shape[1]
    return {
        "w1": params["w1"].astype(jnp.bfloat16),
        "b1": params["b1"].astype(jnp.float32).reshape(1, d_ff),
        "w2": params["w2"].astype(jnp.bfloat16),
        "b2": params["b2"].astype(jnp.float32).reshape(1, d_model),
    }


def feed_forward_block(x, params, *, block_rows=None, ff_chunk=None,
                       out_dtype=None, vmem_budget_bytes=_VMEM_BUDGET):
    """y = linear_2(relu(linear_1(x))); x has shape (..., d_model)."""
    w1, b1, w2, b2 = params["w1"], params["b1"], params["w2"], params["b2"]
    # Fallback cast only; prefer prepare_ffn_params() so this is off the hot path.
    if w1.dtype != jnp.bfloat16:
        w1 = w1.astype(jnp.bfloat16)
    if w2.dtype != jnp.bfloat16:
        w2 = w2.astype(jnp.bfloat16)
    b1 = b1.reshape(1, -1).astype(jnp.float32)
    b2 = b2.reshape(1, -1).astype(jnp.float32)

    orig_shape = x.shape
    D = orig_shape[-1]
    d_ff = w1.shape[1]
    out_dtype = x.dtype if out_dtype is None else out_dtype

    # Fold all leading dims into one row axis so the MXU M dim can be filled.
    xf = x.reshape(-1, D)
    M = xf.shape[0]

    # Row tile: 256 fills the 2x256 MXU (v6e/v7x); 128 matches v5e's 128-wide MXU.
    # (On v6e with its 128 MiB VMEM, block_rows=512 is a reasonable override for huge M.)
    if block_rows is not None:
        tm = block_rows
    elif M >= 256:
        tm = 256
    elif M >= 128:
        tm = 128
    else:
        tm = M  # single tile; block == full array dim satisfies the (8,128) rule

    x_bytes = jnp.dtype(x.dtype).itemsize
    out_bytes = jnp.dtype(out_dtype).itemsize
    if ff_chunk is None:
        tff = _pick_ff_chunk(d_ff, D, tm, x_bytes, out_bytes, vmem_budget_bytes)
    else:
        tff = ff_chunk
    n_ff = max(d_ff // tff, 1)

    n_rows = pl.cdiv(M, tm)

    est = _vmem_estimate(tm, D, tff, n_ff, x_bytes, out_bytes)
    vmem_limit = int(min(max(est, 32 * 1024 * 1024), 112 * 1024 * 1024))

    const_w = 1 if n_ff == 1 else None  # single-buffer weights only when constant

    in_specs = [
        _spec((tm, D), lambda i, k: (i, 0)),                    # x rows (tiled)
        _spec((D, tff), lambda i, k: (0, k), buffers=const_w),  # w1 d_ff-column chunk
        _spec((1, tff), lambda i, k: (0, k), buffers=const_w),  # b1 chunk
        _spec((tff, D), lambda i, k: (k, 0), buffers=const_w),  # w2 d_ff-row chunk
        _spec((1, D), lambda i, k: (0, 0), buffers=1),          # b2 (constant, 1 buffer)
    ]
    out_spec = _spec((tm, D), lambda i, k: (i, 0))

    out = pl.pallas_call(
        _ffn_kernel,
        out_shape=jax.ShapeDtypeStruct((M, D), out_dtype),
        grid_spec=pltpu.PrefetchScalarGridSpec(
            num_scalar_prefetch=0,
            grid=(n_rows, n_ff),
            in_specs=in_specs,
            out_specs=out_spec,
            scratch_shapes=[pltpu.VMEM((tm, D), jnp.float32)],
        ),
        compiler_params=pltpu.CompilerParams(
            dimension_semantics=("parallel", "arbitrary"),
            vmem_limit_bytes=vmem_limit,
        ),
    )(xf, w1, b1, w2, b2)

    return out.reshape(orig_shape)


# ----------------------------- pure-JAX reference -----------------------------
def _reference(x, params):
    h = jnp.maximum(x @ params["w1"] + params["b1"], 0.0)
    return h @ params["w2"] + params["b2"]


if __name__ == "__main__":
    # Small shapes consistent with the module: (batch, seq, d_model), d_ff.
    B, S, D, D_FF = 2, 8, 32, 64

    key = jax.random.PRNGKey(0)
    k0, k1, k2 = jax.random.split(key, 3)
    scale = 0.05
    raw_params = {
        "w1": scale * jax.random.normal(k0, (D, D_FF), jnp.float32),
        "b1": 0.01 * jnp.ones((D_FF,), jnp.float32),
        "w2": scale * jax.random.normal(k1, (D_FF, D), jnp.float32),
        "b2": -0.01 * jnp.ones((D,), jnp.float32),
    }
    # One-time bf16 weight conversion: keeps the cast off the per-call path.
    params = prepare_ffn_params(raw_params)

    x = jax.random.normal(k2, (B, S, D), jnp.float32)

    out = jax.block_until_ready(feed_forward_block(x, params))
    ref = jax.block_until_ready(_reference(x, raw_params))

    assert out.shape == (B, S, D) and out.dtype == x.dtype
    # Tolerance accounts for bf16 MXU inputs (f32 accumulation).
    np.testing.assert_allclose(np.asarray(out), np.asarray(ref),
                               rtol=2e-2, atol=2e-2)
    print("KERNEL_OK")
</pallas_src>

<mosaic_0001>
module attributes {stable_mosaic.version = 11 : i64} {
  func.func @_ffn_kernel(%arg0: i32, %arg1: i32, %arg2: memref<16x32xf32, #tpu.memory_space<vmem>>, %arg3: memref<32x64xbf16, #tpu.memory_space<vmem>>, %arg4: memref<1x64xf32, #tpu.memory_space<vmem>>, %arg5: memref<64x32xbf16, #tpu.memory_space<vmem>>, %arg6: memref<1x32xf32, #tpu.memory_space<vmem>>, %arg7: memref<16x32xf32, #tpu.memory_space<vmem>>, %arg8: memref<16x32xf32, #tpu.memory_space<vmem>>) attributes {dimension_semantics = [#tpu.dimension_semantics<parallel>, #tpu.dimension_semantics<arbitrary>], iteration_bounds = array<i64: 1, 1>, scalar_prefetch = 0 : i64, scratch_operands = 1 : i64, tpu.core_type = #tpu.core_type<tc>, window_params = [{transform_indices = @transform_0, window_bounds = array<i64: 16, 32>}, {pipeline_mode = #tpu.pipeline_mode<synchronous>, transform_indices = @transform_1, window_bounds = array<i64: 32, 64>}, {pipeline_mode = #tpu.pipeline_mode<synchronous>, transform_indices = @transform_2, window_bounds = array<i64: 1, 64>}, {pipeline_mode = #tpu.pipeline_mode<synchronous>, transform_indices = @transform_3, window_bounds = array<i64: 64, 32>}, {pipeline_mode = #tpu.pipeline_mode<synchronous>, transform_indices = @transform_4, window_bounds = array<i64: 1, 32>}, {transform_indices = @transform_5, window_bounds = array<i64: 16, 32>}]} {
    %c0_i32 = arith.constant 0 : i32
    %0 = arith.cmpi eq, %arg1, %c0_i32 : i32
    %1 = arith.extui %0 : i1 to i32
    %c0_i32_0 = arith.constant 0 : i32
    %2 = arith.cmpi ne, %1, %c0_i32_0 : i32
    scf.if %2 {
      %cst_16 = arith.constant 0.000000e+00 : f32
      %21 = vector.broadcast %cst_16 : f32 to vector<16x32xf32>
      %c0_17 = arith.constant 0 : index
      %c0_18 = arith.constant 0 : index
      %22 = vector.load %arg8[%c0_17, %c0_18] : memref<16x32xf32, #tpu.memory_space<vmem>>, vector<16x32xf32>
      tpu.vector_store %arg8[%c0_17, %c0_18], %21 {strides = array<i32>} : memref<16x32xf32, #tpu.memory_space<vmem>>, vector<16x32xf32>,
    } else {
    }
    %c0 = arith.constant 0 : index
    %c0_1 = arith.constant 0 : index
    %3 = vector.load %arg2[%c0, %c0_1] : memref<16x32xf32, #tpu.memory_space<vmem>>, vector<16x32xf32>
    %4 = arith.truncf %3 : vector<16x32xf32> to vector<16x32xbf16>
    %c0_2 = arith.constant 0 : index
    %c0_3 = arith.constant 0 : index
    %5 = vector.load %arg3[%c0_2, %c0_3] : memref<32x64xbf16, #tpu.memory_space<vmem>>, vector<32x64xbf16>
    %cst = arith.constant dense<0.000000e+00> : vector<16x64xf32>
    %6 = tpu.matmul %4, %5, %cst {dimension_numbers = #tpu.dot_dimension_numbers<[1], [0], [0], [1], [0, 0, 1, 1], [], []>} : vector<16x32xbf16>, vector<32x64xbf16>, vector<16x64xf32> -> vector<16x64xf32>
    %c0_4 = arith.constant 0 : index
    %c0_5 = arith.constant 0 : index
    %7 = vector.load %arg4[%c0_4, %c0_5] : memref<1x64xf32, #tpu.memory_space<vmem>>, vector<1x64xf32>
    %8 = vector.broadcast %7 : vector<1x64xf32> to vector<16x64xf32>
    %9 = arith.addf %6, %8 : vector<16x64xf32>
    %cst_6 = arith.constant 0.000000e+00 : f32
    %10 = vector.broadcast %cst_6 : f32 to vector<16x64xf32>
    %11 = arith.maximumf %9, %10 : vector<16x64xf32>
    %c0_7 = arith.constant 0 : index
    %c0_8 = arith.constant 0 : index
    %12 = vector.load %arg8[%c0_7, %c0_8] : memref<16x32xf32, #tpu.memory_space<vmem>>, vector<16x32xf32>
    %13 = arith.truncf %11 : vector<16x64xf32> to vector<16x64xbf16>
    %c0_9 = arith.constant 0 : index
    %c0_10 = arith.constant 0 : index
    %14 = vector.load %arg5[%c0_9, %c0_10] : memref<64x32xbf16, #tpu.memory_space<vmem>>, vector<64x32xbf16>
    %cst_11 = arith.constant dense<0.000000e+00> : vector<16x32xf32>
    %15 = tpu.matmul %13, %14, %cst_11 {dimension_numbers = #tpu.dot_dimension_numbers<[1], [0], [0], [1], [0, 0, 1, 1], [], []>} : vector<16x64xbf16>, vector<64x32xbf16>, vector<16x32xf32> -> vector<16x32xf32>
    %16 = arith.addf %12, %15 : vector<16x32xf32>
    %c0_12 = arith.constant 0 : index
    %c0_13 = arith.constant 0 : index
    %17 = vector.load %arg8[%c0_12, %c0_13] : memref<16x32xf32, #tpu.memory_space<vmem>>, vector<16x32xf32>
    tpu.vector_store %arg8[%c0_12, %c0_13], %16 {strides = array<i32>} : memref<16x32xf32, #tpu.memory_space<vmem>>, vector<16x32xf32>,
    %c0_i32_14 = arith.constant 0 : i32
    %18 = arith.cmpi eq, %arg1, %c0_i32_14 : i32
    %19 = arith.extui %18 : i1 to i32
    %c0_i32_15 = arith.constant 0 : i32
    %20 = arith.cmpi ne, %19, %c0_i32_15 : i32
    scf.if %20 {
      %c0_16 = arith.constant 0 : index
      %c0_17 = arith.constant 0 : index
      %21 = vector.load %arg8[%c0_16, %c0_17] : memref<16x32xf32, #tpu.memory_space<vmem>>, vector<16x32xf32>
      %c0_18 = arith.constant 0 : index
      %c0_19 = arith.constant 0 : index
      %22 = vector.load %arg6[%c0_18, %c0_19] : memref<1x32xf32, #tpu.memory_space<vmem>>, vector<1x32xf32>
      %23 = vector.broadcast %22 : vector<1x32xf32> to vector<16x32xf32>
      %24 = arith.addf %21, %23 : vector<16x32xf32>
      %c0_20 = arith.constant 0 : index
      %c0_21 = arith.constant 0 : index
      %25 = vector.load %arg7[%c0_20, %c0_21] : memref<16x32xf32, #tpu.memory_space<vmem>>, vector<16x32xf32>
      tpu.vector_store %arg7[%c0_20, %c0_21], %24 {strides = array<i32>} : memref<16x32xf32, #tpu.memory_space<vmem>>, vector<16x32xf32>,
    } else {
    }
    return
  }
  func.func @transform_0(%arg0: i32, %arg1: i32) -> (i32, i32) {
    %c0_i32 = arith.constant 0 : i32
    %c0_i32_0 = arith.constant 0 : i32
    return %arg0, %c0_i32 : i32, i32
  }
  func.func @transform_1(%arg0: i32, %arg1: i32) -> (i32, i32) {
    %c0_i32 = arith.constant 0 : i32
    %c0_i32_0 = arith.constant 0 : i32
    return %c0_i32, %arg1 : i32, i32
  }
  func.func @transform_2(%arg0: i32, %arg1: i32) -> (i32, i32) {
    %c0_i32 = arith.constant 0 : i32
    %c0_i32_0 = arith.constant 0 : i32
    return %c0_i32, %arg1 : i32, i32
  }
  func.func @transform_3(%arg0: i32, %arg1: i32) -> (i32, i32) {
    %c0_i32 = arith.constant 0 : i32
    %c0_i32_0 = arith.constant 0 : i32
    return %arg1, %c0_i32 : i32, i32
  }
  func.func @transform_4(%arg0: i32, %arg1: i32) -> (i32, i32) {
    %c0_i32 = arith.constant 0 : i32
    %c0_i32_0 = arith.constant 0 : i32
    %c0_i32_1 = arith.constant 0 : i32
    return %c0_i32, %c0_i32_0 : i32, i32
  }
  func.func @transform_5(%arg0: i32, %arg1: i32) -> (i32, i32) {
    %c0_i32 = arith.constant 0 : i32
    %c0_i32_0 = arith.constant 0 : i32
    return %arg0, %c0_i32 : i32, i32
  }
}

</mosaic_0001>

<llo_original>
// kernel: tpu_custom_call.1
$region0: #{tpu_custom_call.1}
  #allocation0 [shape = 'u32[]', space=smem, size = 0x4, offset = 0x4, fixed_abs, tag = 'smem constant byte address 0x4 - core index']
  #allocation1 [shape = 'u32[144,128]{1,0:T(1,128)}', space=vmem, size = 0x12000, scoped, tag = 'internal scratch']
  #allocation2 [shape = 'f32[16,32]{1,0:T(8,128)}', space=vmem, size = 0x2000, scoped, tag = 'scratch operand']
  %s0 = inlined_call_operand.vmem [shape: f32[16,32], index: 0, kind: input, shape index: {}]
  %s1 = inlined_call_operand.vmem [shape: bf16[32,64], index: 1, kind: input, shape index: {}]
  %s2 = inlined_call_operand.vmem [shape: f32[1,64], index: 2, kind: input, shape index: {}]
  %s3 = inlined_call_operand.vmem [shape: bf16[64,32], index: 3, kind: input, shape index: {}]
  %s4 = inlined_call_operand.vmem [shape: f32[1,32], index: 4, kind: input, shape index: {}]
  %s5 = inlined_call_operand.hbm [shape: f32[16,32], index: 5, kind: output, shape index: {}]
  %s6 = sld [smem:[#allocation0]]
  $region38: #{tpu_custom_call.1} parent=0
    _
  %s8 = ssub.s32 1, %s6
  %s9 = scalar_select 0, %s8, %s6
  $region1: #{tpu_custom_call.1} parent=0
    #allocation3 [shape = 'u8[8192]{0}', space=vmem, size = 0x2000, scoped, tag = 'output window, operand 0, single buffered']
    #allocation4 [shape = 's32[1]{0}', space=sflag, size = 0x4, scoped, tag = 'scoped memory for tpu_custom_call.1']
    %10 = vsyncpa [#allocation4], 0
    // Predicated region
    $region2: #{tpu_custom_call.1} parent=1 // pred_check
      _
    $region3: #{tpu_custom_call.1} parent=1 // pred_check_branch
      %12 = sbr.rel (0) target = $region5
    $region4: #{tpu_custom_call.1} parent=1 // pred_region
      _
    $region5: #{tpu_custom_call.1} parent=1 // pred_fallthru
      _
    // Predicated region
    $region6: #{tpu_custom_call.1} parent=1 // pred_check
      _
    $region7: #{tpu_custom_call.1} parent=1 // pred_check_branch
      %14 = sbr.rel (0) target = $region9
    $region8: #{tpu_custom_call.1} parent=1 // pred_region
      _
    $region9: #{tpu_custom_call.1} parent=1 // pred_fallthru
      _
    // Predicated region
    $region10: #{tpu_custom_call.1} parent=1 // pred_check
      _
    $region11: #{tpu_custom_call.1} parent=1 // pred_check_branch
      %16 = sbr.rel (0) target = $region13
    $region12: #{tpu_custom_call.1} parent=1 // pred_region
      _
    $region13: #{tpu_custom_call.1} parent=1 // pred_fallthru
      _
    // Predicated region
    $region14: #{tpu_custom_call.1} parent=1 // pred_check
      _
    $region15: #{tpu_custom_call.1} parent=1 // pred_check_branch
      %18 = sbr.rel (0) target = $region17
    $region16: #{tpu_custom_call.1} parent=1 // pred_region
      _
    $region17: #{tpu_custom_call.1} parent=1 // pred_fallthru
      _
    // Predicated region
    $region18: #{tpu_custom_call.1} parent=1 // pred_check
      _
    $region19: #{tpu_custom_call.1} parent=1 // pred_check_branch
      %20 = sbr.rel (0) target = $region21
    $region20: #{tpu_custom_call.1} parent=1 // pred_region
      _
    $region21: #{tpu_custom_call.1} parent=1 // pred_fallthru
      _
    %p22 = scmp.eq.s32.totalorder 0, 0
    // Predicated region
    $region22: #{tpu_custom_call.1} parent=1 // pred_check
      %p23 = pneg %p22
    $region23: #{tpu_custom_call.1} parent=1 // pred_check_branch
      %25 = sbr.rel (%p23) target = $region25
    $region24: #{tpu_custom_call.1} parent=1 // pred_region
      %vm26 = vcmask 261120
      %27 = vst.msk [vmem:[#allocation2] sm:$0xff] %vm26, 0.0
      %28 = vst.msk [vmem:[#allocation2 + $0x8] sm:$0xff] %vm26, 0.0
    $region25: #{tpu_custom_call.1} parent=1 // pred_fallthru
      _
    %v29 = vld [vmem:[%s0] sm:$0xff]
    %v30 = vld [vmem:[%s0 + $0x8] sm:$0xff]
    %v31 = vpack.c.bf16 %v30, %v29
    %v32 = vld [vmem:[%s1] sm:$0xf]
    %v33 = vld [vmem:[%s1 + $0x4] sm:$0xf]
    %v34 = vld [vmem:[%s1 + $0x8] sm:$0xf]
    %v35 = vld [vmem:[%s1 + $0xc] sm:$0xf]
    %v36 = vld [vmem:[%s2] sm:$0x1]
    %v38 = vlaneseq
    %v39 = vshrl.u32 %v38, 7
    %v40 = vsub.s32 0, %v39
    %v41 = vrot.slane %v36, %v40
    %v47 = vunpack.c.l.b16 %v32
    %v48 = vunpack.c.l.b16 %v33
    %v49 = vunpack.c.l.b16 %v34
    %v50 = vunpack.c.l.b16 %v35
    %v51 = vpack.c.b16 %v48, %v47
    %v52 = vpack.c.b16 %v50, %v49
    %vm55 = vcmask 261120
    %v57 = vsel %vm55, %v31, 0
    %59 = vmatprep.subr.bf16.mxu0 0
    %60 = vmatpush1.bf16.msra.mxu0 0
    %61 = vmatprep.subr.bf16.mxu0 0
    %62 = vmatpush1.bf16.msra.mxu0 0
    %63 = vmatprep.subr.bf16.mxu0 0
    %64 = vmatpush1.bf16.msra.mxu0 0
    %65 = vmatprep.subr.bf16.mxu0 0
    %66 = vmatpush1.bf16.msra.mxu0 0
    %67 = vmatprep.subr.bf16.mxu0 0
    %68 = vmatpush1.bf16.msra.mxu0 0
    %69 = vmatprep.subr.bf16.mxu0 0
    %70 = vmatpush1.bf16.msra.mxu0 0
    %71 = vmatprep.subr.bf16.mxu0 0
    %72 = vmatpush1.bf16.msra.mxu0 %v52
    %73 = vmatprep.subr.bf16.mxu0 0
    %74 = vmatpush1.bf16.msra.mxu0 %v51
    %75 = vmatprep.subr.bf16.mxu0 0
    %76 = vmatpush2.bf16.msra.mxu0 0
    %77 = vmatprep.subr.bf16.mxu0 0
    %78 = vmatpush2.bf16.msra.mxu0 0
    %79 = vmatprep.subr.bf16.mxu0 0
    %80 = vmatpush2.bf16.msra.mxu0 0
    %81 = vmatprep.subr.bf16.mxu0 0
    %82 = vmatpush2.bf16.msra.mxu0 0
    %83 = vmatprep.subr.bf16.mxu0 0
    %84 = vmatpush2.bf16.msra.mxu0 0
    %85 = vmatprep.subr.bf16.mxu0 0
    %86 = vmatpush2.bf16.msra.mxu0 0
    %87 = vmatprep.subr.bf16.mxu0 0
    %88 = vmatpush2.bf16.msra.mxu0 0
    %89 = vmatprep.subr.bf16.mxu0 0
    %90 = vmatpush2.bf16.msra.mxu0 0
    %91 = vmatprep.mubr.bf16.mxu0 0
    %92 = vmatmul.mubr.bf16.gmra.mxu0 %v57
    %v93 = vpop.f32.mrf.mxu0
    %v94 = vadd.f32 %v41, %v93
    %v95 = vpop.f32.mrf.mxu0
    %v96 = vpop.f32.mrf.mxu0
    %v97 = vadd.f32 %v41, %v96
    %v98 = vpop.f32.mrf.mxu0
    %99 = vdwg.mxu0
    %v100 = vmax.f32 %v94, 0.0
    %v101 = vmax.f32 %v97, 0.0
    %v102 = vld [vmem:[#allocation2] sm:$0xff]
    %v103 = vld [vmem:[#allocation2 + $0x8] sm:$0xff]
    %v104 = vpack.c.bf16 %v101, %v100
    %v105 = vld [vmem:[%s3] sm:$0xf]
    %v106 = vld [vmem:[%s3 + $0x4] sm:$0xf]
    %v107 = vld [vmem:[%s3 + $0x8] sm:$0xf]
    %v108 = vld [vmem:[%s3 + $0xc] sm:$0xf]
    %v109 = vld [vmem:[%s3 + $0x10] sm:$0xf]
    %v110 = vld [vmem:[%s3 + $0x14] sm:$0xf]
    %v111 = vld [vmem:[%s3 + $0x18] sm:$0xf]
    %v112 = vld [vmem:[%s3 + $0x1c] sm:$0xf]
    %v121 = vunpack.c.l.b16 %v105
    %v122 = vunpack.c.l.b16 %v106
    %v123 = vunpack.c.l.b16 %v107
    %v124 = vunpack.c.l.b16 %v108
    %v125 = vunpack.c.l.b16 %v109
    %v126 = vunpack.c.l.b16 %v110
    %v127 = vunpack.c.l.b16 %v111
    %v128 = vunpack.c.l.b16 %v112
    %v129 = vpack.c.b16 %v122, %v121
    %v130 = vpack.c.b16 %v124, %v123
    %v131 = vpack.c.b16 %v126, %v125
    %v132 = vpack.c.b16 %v128, %v127
    %vm137 = vcmask 523264
    %v139 = vsel %vm137, %v104, 0
    %141 = vmatprep.subr.bf16.mxu0 0
    %142 = vmatpush1.bf16.msra.mxu0 0
    %143 = vmatprep.subr.bf16.mxu0 0
    %144 = vmatpush1.bf16.msra.mxu0 0
    %145 = vmatprep.subr.bf16.mxu0 0
    %146 = vmatpush1.bf16.msra.mxu0 0
    %147 = vmatprep.subr.bf16.mxu0 0
    %148 = vmatpush1.bf16.msra.mxu0 0
    %149 = vmatprep.subr.bf16.mxu0 0
    %150 = vmatpush1.bf16.msra.mxu0 %v132
    %151 = vmatprep.subr.bf16.mxu0 0
    %152 = vmatpush1.bf16.msra.mxu0 %v131
    %153 = vmatprep.subr.bf16.mxu0 0
    %154 = vmatpush1.bf16.msra.mxu0 %v130
    %155 = vmatprep.subr.bf16.mxu0 0
    %156 = vmatpush1.bf16.msra.mxu0 %v129
    %157 = vmatprep.subr.bf16.mxu0 0
    %158 = vmatpush2.bf16.msra.mxu0 0
    %159 = vmatprep.subr.bf16.mxu0 0
    %160 = vmatpush2.bf16.msra.mxu0 0
    %161 = vmatprep.subr.bf16.mxu0 0
    %162 = vmatpush2.bf16.msra.mxu0 0
    %163 = vmatprep.subr.bf16.mxu0 0
    %164 = vmatpush2.bf16.msra.mxu0 0
    %165 = vmatprep.subr.bf16.mxu0 0
    %166 = vmatpush2.bf16.msra.mxu0 0
    %167 = vmatprep.subr.bf16.mxu0 0
    %168 = vmatpush2.bf16.msra.mxu0 0
    %169 = vmatprep.subr.bf16.mxu0 0
    %170 = vmatpush2.bf16.msra.mxu0 0
    %171 = vmatprep.subr.bf16.mxu0 0
    %172 = vmatpush2.bf16.msra.mxu0 0
    %173 = vmatprep.mubr.bf16.mxu0 0
    %174 = vmatmul.mubr.bf16.gmra.mxu0 %v139
    %v175 = vpop.f32.mrf.mxu0
    %v176 = vadd.f32 0.0, %v175
    %v177 = vpop.f32.mrf.mxu0
    %v178 = vpop.f32.mrf.mxu0
    %v179 = vadd.f32 0.0, %v178
    %v180 = vpop.f32.mrf.mxu0
    %181 = vdwg.mxu0
    %v182 = vadd.f32 %v102, %v176
    %v183 = vadd.f32 %v103, %v179
    %184 = vst.msk [vmem:[#allocation2] sm:$0xff] %vm55, %v182
    %185 = vst.msk [vmem:[#allocation2 + $0x8] sm:$0xff] %vm55, %v183
    // Predicated region
    $region26: #{tpu_custom_call.1} parent=1 // pred_check
      %p186 = pneg %p22
    $region27: #{tpu_custom_call.1} parent=1 // pred_check_branch
      %188 = sbr.rel (%p186) target = $region29
    $region28: #{tpu_custom_call.1} parent=1 // pred_region
      %v189 = vld [vmem:[#allocation2] sm:$0xff]
      %v190 = vld [vmem:[#allocation2 + $0x8] sm:$0xff]
      %v191 = vld [vmem:[%s4] sm:$0x1]
      %v193 = vlaneseq
      %v194 = vshrl.u32 %v193, 7
      %v195 = vsub.s32 0, %v194
      %v196 = vrot.slane %v191, %v195
      %v198 = vadd.f32 %v189, %v196
      %v199 = vadd.f32 %v190, %v196
      %200 = vst.msk [vmem:[#allocation3] sm:$0xff] %vm55, %v198
      %201 = vst.msk [vmem:[#allocation3 + $0x8] sm:$0xff] %vm55, %v199
    $region29: #{tpu_custom_call.1} parent=1 // pred_fallthru
      _
    // Predicated region
    $region30: #{tpu_custom_call.1} parent=1 // pred_check
      _
    $region31: #{tpu_custom_call.1} parent=1 // pred_check_branch
      %203 = sbr.rel (0) target = $region33
    $region32: #{tpu_custom_call.1} parent=1 // pred_region
      %s205 = ssub.s32 256, 256
      %206 = vsyncadd [#allocation4], %s205
      %s207 = sshll.u32 [#allocation3], 4
      %s208 = int_to_ptr.vmem [resolvable:$true] %s207
      %213 = dma.vmem_to_hbm [thread:$0]  %s208, 256, %s5, [#allocation4], 128, 128, 8
    $region33: #{tpu_custom_call.1} parent=1 // pred_fallthru
      _
    // Predicated region
    $region34: #{tpu_custom_call.1} parent=1 // pred_check
      _
    $region35: #{tpu_custom_call.1} parent=1 // pred_check_branch
      %215 = sbr.rel (0) target = $region37
    $region36: #{tpu_custom_call.1} parent=1 // pred_region
      %216 = dma.done [#allocation4], 256
    $region37: #{tpu_custom_call.1} parent=1 // pred_fallthru
      _
    %217 = vsyncpa [#allocation4], 1

</llo_original>
